<compile_context>
chip_gen: v7x
topology: tpu7x:2x2x1
jax: 0.10.0
libtpu: 0.0.40
codegen_flags: <defaults>
</compile_context>

<pallas_src>
import functools

import jax
import jax.numpy as jnp
from jax.experimental import pallas as pl
from jax.experimental.pallas import tpu as pltpu


# ----------------------------- kernel ---------------------------------------


def mha_kernel(x_ref, wqkv_ref, wproj_ref, bproj_ref, o_ref, *,
               num_heads, head_size):
    """Fused multi-head causal attention + output projection, one batch element.

    x_ref    : (1, T, C)   bf16 activations
    wqkv_ref : (C, 3C)     bf16 fused [Q(scaled) | K | V] weights, head-major cols
    wproj_ref: (C, C)      bf16 output projection weight (x @ W form)
    bproj_ref: (1, C)      f32 output projection bias
    o_ref    : (1, T, C)   output (lane-dense store)
    """
    H, hs = num_heads, head_size
    C = H * hs

    x = x_ref[0]                                                       # (T, C)
    T = x.shape[0]

    # One wide MXU matmul for all heads' Q/K/V.  f32 accumulation.
    qkv = jnp.dot(x, wqkv_ref[...], preferred_element_type=jnp.float32)  # (T, 3C)

    # Causal mask, shared across heads.
    row = jax.lax.broadcasted_iota(jnp.int32, (T, T), 0)
    col = jax.lax.broadcasted_iota(jnp.int32, (T, T), 1)
    causal = col <= row
    neg_big = jnp.float32(-1e30)  # finite: no NaN even for fully-masked rows

    head_outs = []
    for h in range(H):  # static loop; H is small
        q = qkv[:, h * hs:(h + 1) * hs].astype(jnp.bfloat16)           # scale pre-folded
        k = qkv[:, C + h * hs:C + (h + 1) * hs].astype(jnp.bfloat16)
        v = qkv[:, 2 * C + h * hs:2 * C + (h + 1) * hs].astype(jnp.bfloat16)

        # q @ k^T in "nt" form: contract last dims, no transpose materialized.
        s = jax.lax.dot_general(
            q, k, dimension_numbers=(((1,), (1,)), ((), ())),
            preferred_element_type=jnp.float32)                        # (T, T) f32
        s = jnp.where(causal, s, neg_big)

        # Softmax in f32; normalization via approximate reciprocal (EUP).
        s = s - jnp.max(s, axis=-1, keepdims=True)
        p = jnp.exp(s)
        p = p * pl.reciprocal(jnp.sum(p, axis=-1, keepdims=True), approx=True)

        head_outs.append(
            jnp.dot(p.astype(jnp.bfloat16), v,
                    preferred_element_type=jnp.float32))               # (T, hs)

    cat = jnp.concatenate(head_outs, axis=-1)                          # (T, C) f32

    # Fused output projection + bias.
    y = jnp.dot(cat.astype(jnp.bfloat16), wproj_ref[...],
                preferred_element_type=jnp.float32)
    y = y + bproj_ref[...]                                             # f32 VPU add
    o_ref[0] = y.astype(o_ref.dtype)


# ----------------------------- wrapper ---------------------------------------


def multi_head_attention(x, wq, wk, wv, w_proj, b_proj):
    """x: (B, T, C); wq/wk/wv: (H, C, hs) stored as x@W (PyTorch weight^T);
    w_proj: (C, C) (also x@W form); b_proj: (1, C)."""
    B, T, C = x.shape
    H, _, hs = wq.shape
    assert H * hs == C

    scale = jnp.float32(hs) ** -0.5
    # (H, C, hs) -> (C, H*hs), head-major columns (matches torch.cat head order).
    wq_all = jnp.transpose(wq, (1, 0, 2)).reshape(C, C) * scale  # fold scale into Q
    wk_all = jnp.transpose(wk, (1, 0, 2)).reshape(C, C)
    wv_all = jnp.transpose(wv, (1, 0, 2)).reshape(C, C)
    wqkv = jnp.concatenate([wq_all, wk_all, wv_all], axis=-1)    # (C, 3C)

    # bf16 MXU operands; bias stays f32.
    x_bf = x.astype(jnp.bfloat16)
    wqkv_bf = wqkv.astype(jnp.bfloat16)
    wproj_bf = w_proj.astype(jnp.bfloat16)
    b_proj_f32 = b_proj.astype(jnp.float32)

    kernel = functools.partial(mha_kernel, num_heads=H, head_size=hs)

    return pl.pallas_call(
        kernel,
        out_shape=jax.ShapeDtypeStruct((B, T, C), x.dtype),
        grid=(B,),
        in_specs=[
            pl.BlockSpec((1, T, C), lambda b: (b, 0, 0)),
            pl.BlockSpec((C, 3 * C), lambda b: (0, 0)),  # VMEM-resident across grid
            pl.BlockSpec((C, C), lambda b: (0, 0)),
            pl.BlockSpec((1, C), lambda b: (0, 0)),
        ],
        out_specs=pl.BlockSpec((1, T, C), lambda b: (b, 0, 0)),
        compiler_params=pltpu.CompilerParams(
            dimension_semantics=("parallel",),
            vmem_limit_bytes=64 * 1024 * 1024),
    )(x_bf, wqkv_bf, wproj_bf, b_proj_f32)


# --------------------------- pure-JAX reference -------------------------------


def reference(x, wq, wk, wv, w_proj, b_proj):
    B, T, C = x.shape
    H, _, hs = wq.shape
    outs = []
    for h in range(H):
        q = x @ wq[h]
        k = x @ wk[h]
        v = x @ wv[h]
        wei = (q @ jnp.swapaxes(k, -2, -1)) * (hs ** -0.5)
        mask = jnp.tril(jnp.ones((T, T), dtype=bool))
        wei = jnp.where(mask, wei, -jnp.inf)
        wei = jax.nn.softmax(wei, axis=-1)
        outs.append(wei @ v)
    cat = jnp.concatenate(outs, axis=-1)
    return cat @ w_proj + b_proj[0]


# ----------------------------- main ------------------------------------------


if __name__ == "__main__":
    # Small shapes consistent with the module structure.
    B, T = 2, 8
    n_embd = 32
    num_heads = 4
    head_size = n_embd // num_heads

    key = jax.random.PRNGKey(0)
    kx, kq, kk, kv, kp, kb = jax.random.split(key, 6)

    x = jax.random.normal(kx, (B, T, n_embd), dtype=jnp.float32)
    # Per-head projection weights stored as x @ W (i.e. PyTorch weight^T).
    wq = jax.random.normal(kq, (num_heads, n_embd, head_size), jnp.float32) * 0.1
    wk = jax.random.normal(kk, (num_heads, n_embd, head_size), jnp.float32) * 0.1
    wv = jax.random.normal(kv, (num_heads, n_embd, head_size), jnp.float32) * 0.1
    w_proj = jax.random.normal(kp, (n_embd, n_embd), jnp.float32) * 0.1
    b_proj = jax.random.normal(kb, (1, n_embd), jnp.float32) * 0.1

    out = multi_head_attention(x, wq, wk, wv, w_proj, b_proj)
    out = jax.block_until_ready(out)

    ref = reference(x, wq, wk, wv, w_proj, b_proj)
    assert out.shape == (B, T, n_embd)
    # bf16 MXU operands + approx reciprocal vs. all-f32 reference -> loose tol.
    assert jnp.allclose(out, ref, atol=5e-2, rtol=5e-2), "mismatch vs reference"

    print("KERNEL_OK")
</pallas_src>

<mosaic_0001>
module attributes {stable_mosaic.version = 11 : i64} {
  func.func @mha_kernel(%arg0: i32, %arg1: memref<1x8x32xbf16, #tpu.memory_space<vmem>>, %arg2: memref<32x96xbf16, #tpu.memory_space<vmem>>, %arg3: memref<32x32xbf16, #tpu.memory_space<vmem>>, %arg4: memref<1x32xf32, #tpu.memory_space<vmem>>, %arg5: memref<1x8x32xf32, #tpu.memory_space<vmem>>) attributes {dimension_semantics = [#tpu.dimension_semantics<parallel>], iteration_bounds = array<i64: 2>, scalar_prefetch = 0 : i64, scratch_operands = 0 : i64, tpu.core_type = #tpu.core_type<tc>, window_params = [{transform_indices = @transform_0, window_bounds = array<i64: 1, 8, 32>}, {pipeline_mode = #tpu.pipeline_mode<synchronous>, transform_indices = @transform_1, window_bounds = array<i64: 32, 96>}, {pipeline_mode = #tpu.pipeline_mode<synchronous>, transform_indices = @transform_2, window_bounds = array<i64: 32, 32>}, {pipeline_mode = #tpu.pipeline_mode<synchronous>, transform_indices = @transform_3, window_bounds = array<i64: 1, 32>}, {transform_indices = @transform_4, window_bounds = array<i64: 1, 8, 32>}]} {
    %c0 = arith.constant 0 : index
    %c0_0 = arith.constant 0 : index
    %c0_1 = arith.constant 0 : index
    %0 = vector.load %arg1[%c0, %c0_0, %c0_1] : memref<1x8x32xbf16, #tpu.memory_space<vmem>>, vector<1x8x32xbf16>
    %1 = vector.shape_cast %0 : vector<1x8x32xbf16> to vector<8x32xbf16>
    %c0_2 = arith.constant 0 : index
    %c0_3 = arith.constant 0 : index
    %2 = vector.load %arg2[%c0_2, %c0_3] : memref<32x96xbf16, #tpu.memory_space<vmem>>, vector<32x96xbf16>
    %cst = arith.constant dense<0.000000e+00> : vector<8x96xf32>
    %3 = tpu.matmul %1, %2, %cst {dimension_numbers = #tpu.dot_dimension_numbers<[1], [0], [0], [1], [0, 0, 1, 1], [], []>} : vector<8x32xbf16>, vector<32x96xbf16>, vector<8x96xf32> -> vector<8x96xf32>
    %4 = tpu.iota {dimensions = array<i32: 0>} : vector<8x8xi32>
    %5 = tpu.iota {dimensions = array<i32: 1>} : vector<8x8xi32>
    %6 = arith.cmpi sle, %5, %4 : vector<8x8xi32>
    %7 = vector.extract_strided_slice %3 {offsets = [0, 0], sizes = [8, 8], strides = [1, 1]} : vector<8x96xf32> to vector<8x8xf32>
    %8 = arith.truncf %7 : vector<8x8xf32> to vector<8x8xbf16>
    %9 = vector.extract_strided_slice %3 {offsets = [0, 32], sizes = [8, 8], strides = [1, 1]} : vector<8x96xf32> to vector<8x8xf32>
    %10 = arith.truncf %9 : vector<8x8xf32> to vector<8x8xbf16>
    %11 = vector.extract_strided_slice %3 {offsets = [0, 64], sizes = [8, 8], strides = [1, 1]} : vector<8x96xf32> to vector<8x8xf32>
    %12 = arith.truncf %11 : vector<8x8xf32> to vector<8x8xbf16>
    %cst_4 = arith.constant dense<0.000000e+00> : vector<8x8xf32>
    %13 = tpu.matmul %8, %10, %cst_4 {dimension_numbers = #tpu.dot_dimension_numbers<[1], [1], [0], [0], [0, 0, 1, 0], [], []>} : vector<8x8xbf16>, vector<8x8xbf16>, vector<8x8xf32> -> vector<8x8xf32>
    %cst_5 = arith.constant -1.000000e+30 : f32
    %14 = vector.broadcast %cst_5 : f32 to vector<8x8xf32>
    %15 = arith.select %6, %13, %14 : vector<8x8xi1>, vector<8x8xf32>
    %cst_6 = arith.constant dense<0xFF800000> : vector<8xf32>
    %16 = vector.multi_reduction <maximumf>, %15, %cst_6 [1] : vector<8x8xf32> to vector<8xf32>
    %17 = vector.shape_cast %16 : vector<8xf32> to vector<8x1xf32>
    %18 = vector.broadcast %17 : vector<8x1xf32> to vector<8x8xf32>
    %19 = arith.subf %15, %18 : vector<8x8xf32>
    %20 = math.exp %19 : vector<8x8xf32>
    %cst_7 = arith.constant dense<0.000000e+00> : vector<8xf32>
    %21 = vector.multi_reduction <add>, %20, %cst_7 [1] : vector<8x8xf32> to vector<8xf32>
    %22 = vector.shape_cast %21 : vector<8xf32> to vector<8x1xf32>
    %23 = tpu.reciprocal %22 {approx = true} : vector<8x1xf32> -> vector<8x1xf32>
    %24 = vector.broadcast %23 : vector<8x1xf32> to vector<8x8xf32>
    %25 = arith.mulf %20, %24 : vector<8x8xf32>
    %26 = arith.truncf %25 : vector<8x8xf32> to vector<8x8xbf16>
    %cst_8 = arith.constant dense<0.000000e+00> : vector<8x8xf32>
    %27 = tpu.matmul %26, %12, %cst_8 {dimension_numbers = #tpu.dot_dimension_numbers<[1], [0], [0], [1], [0, 0, 1, 1], [], []>} : vector<8x8xbf16>, vector<8x8xbf16>, vector<8x8xf32> -> vector<8x8xf32>
    %28 = vector.extract_strided_slice %3 {offsets = [0, 8], sizes = [8, 8], strides = [1, 1]} : vector<8x96xf32> to vector<8x8xf32>
    %29 = arith.truncf %28 : vector<8x8xf32> to vector<8x8xbf16>
    %30 = vector.extract_strided_slice %3 {offsets = [0, 40], sizes = [8, 8], strides = [1, 1]} : vector<8x96xf32> to vector<8x8xf32>
    %31 = arith.truncf %30 : vector<8x8xf32> to vector<8x8xbf16>
    %32 = vector.extract_strided_slice %3 {offsets = [0, 72], sizes = [8, 8], strides = [1, 1]} : vector<8x96xf32> to vector<8x8xf32>
    %33 = arith.truncf %32 : vector<8x8xf32> to vector<8x8xbf16>
    %cst_9 = arith.constant dense<0.000000e+00> : vector<8x8xf32>
    %34 = tpu.matmul %29, %31, %cst_9 {dimension_numbers = #tpu.dot_dimension_numbers<[1], [1], [0], [0], [0, 0, 1, 0], [], []>} : vector<8x8xbf16>, vector<8x8xbf16>, vector<8x8xf32> -> vector<8x8xf32>
    %cst_10 = arith.constant -1.000000e+30 : f32
    %35 = vector.broadcast %cst_10 : f32 to vector<8x8xf32>
    %36 = arith.select %6, %34, %35 : vector<8x8xi1>, vector<8x8xf32>
    %cst_11 = arith.constant dense<0xFF800000> : vector<8xf32>
    %37 = vector.multi_reduction <maximumf>, %36, %cst_11 [1] : vector<8x8xf32> to vector<8xf32>
    %38 = vector.shape_cast %37 : vector<8xf32> to vector<8x1xf32>
    %39 = vector.broadcast %38 : vector<8x1xf32> to vector<8x8xf32>
    %40 = arith.subf %36, %39 : vector<8x8xf32>
    %41 = math.exp %40 : vector<8x8xf32>
    %cst_12 = arith.constant dense<0.000000e+00> : vector<8xf32>
    %42 = vector.multi_reduction <add>, %41, %cst_12 [1] : vector<8x8xf32> to vector<8xf32>
    %43 = vector.shape_cast %42 : vector<8xf32> to vector<8x1xf32>
    %44 = tpu.reciprocal %43 {approx = true} : vector<8x1xf32> -> vector<8x1xf32>
    %45 = vector.broadcast %44 : vector<8x1xf32> to vector<8x8xf32>
    %46 = arith.mulf %41, %45 : vector<8x8xf32>
    %47 = arith.truncf %46 : vector<8x8xf32> to vector<8x8xbf16>
    %cst_13 = arith.constant dense<0.000000e+00> : vector<8x8xf32>
    %48 = tpu.matmul %47, %33, %cst_13 {dimension_numbers = #tpu.dot_dimension_numbers<[1], [0], [0], [1], [0, 0, 1, 1], [], []>} : vector<8x8xbf16>, vector<8x8xbf16>, vector<8x8xf32> -> vector<8x8xf32>
    %49 = vector.extract_strided_slice %3 {offsets = [0, 16], sizes = [8, 8], strides = [1, 1]} : vector<8x96xf32> to vector<8x8xf32>
    %50 = arith.truncf %49 : vector<8x8xf32> to vector<8x8xbf16>
    %51 = vector.extract_strided_slice %3 {offsets = [0, 48], sizes = [8, 8], strides = [1, 1]} : vector<8x96xf32> to vector<8x8xf32>
    %52 = arith.truncf %51 : vector<8x8xf32> to vector<8x8xbf16>
    %53 = vector.extract_strided_slice %3 {offsets = [0, 80], sizes = [8, 8], strides = [1, 1]} : vector<8x96xf32> to vector<8x8xf32>
    %54 = arith.truncf %53 : vector<8x8xf32> to vector<8x8xbf16>
    %cst_14 = arith.constant dense<0.000000e+00> : vector<8x8xf32>
    %55 = tpu.matmul %50, %52, %cst_14 {dimension_numbers = #tpu.dot_dimension_numbers<[1], [1], [0], [0], [0, 0, 1, 0], [], []>} : vector<8x8xbf16>, vector<8x8xbf16>, vector<8x8xf32> -> vector<8x8xf32>
    %cst_15 = arith.constant -1.000000e+30 : f32
    %56 = vector.broadcast %cst_15 : f32 to vector<8x8xf32>
    %57 = arith.select %6, %55, %56 : vector<8x8xi1>, vector<8x8xf32>
    %cst_16 = arith.constant dense<0xFF800000> : vector<8xf32>
    %58 = vector.multi_reduction <maximumf>, %57, %cst_16 [1] : vector<8x8xf32> to vector<8xf32>
    %59 = vector.shape_cast %58 : vector<8xf32> to vector<8x1xf32>
    %60 = vector.broadcast %59 : vector<8x1xf32> to vector<8x8xf32>
    %61 = arith.subf %57, %60 : vector<8x8xf32>
    %62 = math.exp %61 : vector<8x8xf32>
    %cst_17 = arith.constant dense<0.000000e+00> : vector<8xf32>
    %63 = vector.multi_reduction <add>, %62, %cst_17 [1] : vector<8x8xf32> to vector<8xf32>
    %64 = vector.shape_cast %63 : vector<8xf32> to vector<8x1xf32>
    %65 = tpu.reciprocal %64 {approx = true} : vector<8x1xf32> -> vector<8x1xf32>
    %66 = vector.broadcast %65 : vector<8x1xf32> to vector<8x8xf32>
    %67 = arith.mulf %62, %66 : vector<8x8xf32>
    %68 = arith.truncf %67 : vector<8x8xf32> to vector<8x8xbf16>
    %cst_18 = arith.constant dense<0.000000e+00> : vector<8x8xf32>
    %69 = tpu.matmul %68, %54, %cst_18 {dimension_numbers = #tpu.dot_dimension_numbers<[1], [0], [0], [1], [0, 0, 1, 1], [], []>} : vector<8x8xbf16>, vector<8x8xbf16>, vector<8x8xf32> -> vector<8x8xf32>
    %70 = vector.extract_strided_slice %3 {offsets = [0, 24], sizes = [8, 8], strides = [1, 1]} : vector<8x96xf32> to vector<8x8xf32>
    %71 = arith.truncf %70 : vector<8x8xf32> to vector<8x8xbf16>
    %72 = vector.extract_strided_slice %3 {offsets = [0, 56], sizes = [8, 8], strides = [1, 1]} : vector<8x96xf32> to vector<8x8xf32>
    %73 = arith.truncf %72 : vector<8x8xf32> to vector<8x8xbf16>
    %74 = vector.extract_strided_slice %3 {offsets = [0, 88], sizes = [8, 8], strides = [1, 1]} : vector<8x96xf32> to vector<8x8xf32>
    %75 = arith.truncf %74 : vector<8x8xf32> to vector<8x8xbf16>
    %cst_19 = arith.constant dense<0.000000e+00> : vector<8x8xf32>
    %76 = tpu.matmul %71, %73, %cst_19 {dimension_numbers = #tpu.dot_dimension_numbers<[1], [1], [0], [0], [0, 0, 1, 0], [], []>} : vector<8x8xbf16>, vector<8x8xbf16>, vector<8x8xf32> -> vector<8x8xf32>
    %cst_20 = arith.constant -1.000000e+30 : f32
    %77 = vector.broadcast %cst_20 : f32 to vector<8x8xf32>
    %78 = arith.select %6, %76, %77 : vector<8x8xi1>, vector<8x8xf32>
    %cst_21 = arith.constant dense<0xFF800000> : vector<8xf32>
    %79 = vector.multi_reduction <maximumf>, %78, %cst_21 [1] : vector<8x8xf32> to vector<8xf32>
    %80 = vector.shape_cast %79 : vector<8xf32> to vector<8x1xf32>
    %81 = vector.broadcast %80 : vector<8x1xf32> to vector<8x8xf32>
    %82 = arith.subf %78, %81 : vector<8x8xf32>
    %83 = math.exp %82 : vector<8x8xf32>
    %cst_22 = arith.constant dense<0.000000e+00> : vector<8xf32>
    %84 = vector.multi_reduction <add>, %83, %cst_22 [1] : vector<8x8xf32> to vector<8xf32>
    %85 = vector.shape_cast %84 : vector<8xf32> to vector<8x1xf32>
    %86 = tpu.reciprocal %85 {approx = true} : vector<8x1xf32> -> vector<8x1xf32>
    %87 = vector.broadcast %86 : vector<8x1xf32> to vector<8x8xf32>
    %88 = arith.mulf %83, %87 : vector<8x8xf32>
    %89 = arith.truncf %88 : vector<8x8xf32> to vector<8x8xbf16>
    %cst_23 = arith.constant dense<0.000000e+00> : vector<8x8xf32>
    %90 = tpu.matmul %89, %75, %cst_23 {dimension_numbers = #tpu.dot_dimension_numbers<[1], [0], [0], [1], [0, 0, 1, 1], [], []>} : vector<8x8xbf16>, vector<8x8xbf16>, vector<8x8xf32> -> vector<8x8xf32>
    %91 = tpu.concatenate %27, %48, %69, %90 in 1 : vector<8x8xf32>, vector<8x8xf32>, vector<8x8xf32>, vector<8x8xf32> -> vector<8x32xf32>
    %92 = arith.truncf %91 : vector<8x32xf32> to vector<8x32xbf16>
    %c0_24 = arith.constant 0 : index
    %c0_25 = arith.constant 0 : index
    %93 = vector.load %arg3[%c0_24, %c0_25] : memref<32x32xbf16, #tpu.memory_space<vmem>>, vector<32x32xbf16>
    %cst_26 = arith.constant dense<0.000000e+00> : vector<8x32xf32>
    %94 = tpu.matmul %92, %93, %cst_26 {dimension_numbers = #tpu.dot_dimension_numbers<[1], [0], [0], [1], [0, 0, 1, 1], [], []>} : vector<8x32xbf16>, vector<32x32xbf16>, vector<8x32xf32> -> vector<8x32xf32>
    %c0_27 = arith.constant 0 : index
    %c0_28 = arith.constant 0 : index
    %95 = vector.load %arg4[%c0_27, %c0_28] : memref<1x32xf32, #tpu.memory_space<vmem>>, vector<1x32xf32>
    %96 = vector.broadcast %95 : vector<1x32xf32> to vector<8x32xf32>
    %97 = arith.addf %94, %96 : vector<8x32xf32>
    %c0_29 = arith.constant 0 : index
    %c0_30 = arith.constant 0 : index
    %c0_31 = arith.constant 0 : index
    %98 = vector.load %arg5[%c0_29, %c0_30, %c0_31] : memref<1x8x32xf32, #tpu.memory_space<vmem>>, vector<1x8x32xf32>
    %99 = vector.shape_cast %98 : vector<1x8x32xf32> to vector<8x32xf32>
    %100 = vector.shape_cast %97 : vector<8x32xf32> to vector<1x8x32xf32>
    tpu.vector_store %arg5[%c0_29, %c0_30, %c0_31], %100 {strides = array<i32>} : memref<1x8x32xf32, #tpu.memory_space<vmem>>, vector<1x8x32xf32>,
    return
  }
  func.func @transform_0(%arg0: i32) -> (i32, i32, i32) {
    %c0_i32 = arith.constant 0 : i32
    %c0_i32_0 = arith.constant 0 : i32
    %c0_i32_1 = arith.constant 0 : i32
    return %arg0, %c0_i32, %c0_i32_0 : i32, i32, i32
  }
  func.func @transform_1(%arg0: i32) -> (i32, i32) {
    %c0_i32 = arith.constant 0 : i32
    %c0_i32_0 = arith.constant 0 : i32
    %c0_i32_1 = arith.constant 0 : i32
    return %c0_i32, %c0_i32_0 : i32, i32
  }
  func.func @transform_2(%arg0: i32) -> (i32, i32) {
    %c0_i32 = arith.constant 0 : i32
    %c0_i32_0 = arith.constant 0 : i32
    %c0_i32_1 = arith.constant 0 : i32
    return %c0_i32, %c0_i32_0 : i32, i32
  }
  func.func @transform_3(%arg0: i32) -> (i32, i32) {
    %c0_i32 = arith.constant 0 : i32
    %c0_i32_0 = arith.constant 0 : i32
    %c0_i32_1 = arith.constant 0 : i32
    return %c0_i32, %c0_i32_0 : i32, i32
  }
  func.func @transform_4(%arg0: i32) -> (i32, i32, i32) {
    %c0_i32 = arith.constant 0 : i32
    %c0_i32_0 = arith.constant 0 : i32
    %c0_i32_1 = arith.constant 0 : i32
    return %arg0, %c0_i32, %c0_i32_0 : i32, i32, i32
  }
}

</mosaic_0001>

<llo_original>
// kernel: tpu_custom_call.1
$region0: #{tpu_custom_call.1}
  #allocation0 [shape = 'u32[]', space=smem, size = 0x4, offset = 0x4, fixed_abs, tag = 'smem constant byte address 0x4 - core index']
  #allocation1 [shape = 'u32[144,128]{1,0:T(1,128)}', space=vmem, size = 0x12000, scoped, tag = 'internal scratch']
  %s0 = inlined_call_operand.hbm [shape: bf16[2,8,32], index: 0, kind: input, shape index: {}]
  %s1 = inlined_call_operand.hbm [shape: bf16[32,96], index: 1, kind: input, shape index: {}]
  %s2 = inlined_call_operand.hbm [shape: bf16[32,32], index: 2, kind: input, shape index: {}]
  %s3 = inlined_call_operand.hbm [shape: f32[1,32], index: 3, kind: input, shape index: {}]
  %s4 = inlined_call_operand.hbm [shape: f32[2,8,32], index: 4, kind: output, shape index: {}]
  %s5 = sld [smem:[#allocation0]]
  $region65: #{tpu_custom_call.1} parent=0
    _
  %s7 = ssub.s32 1, %s5
  %s8 = scalar_select 0, %s7, %s5
  $region1: #{tpu_custom_call.1} parent=0
    #allocation2 [shape = 'u8[4096]{0}', space=vmem, size = 0x1000, scoped, tag = 'input window, operand 0']
    #allocation3 [shape = 's32[2]{0}', space=sflag, size = 0x8, scoped, tag = 'scoped memory for tpu_custom_call.1']
    #allocation4 [shape = 's32[2]{0}', space=sflag, size = 0x8, scoped, tag = 'scoped memory for tpu_custom_call.1']
    #allocation5 [shape = 'u8[8192]{0}', space=vmem, size = 0x2000, scoped, tag = 'input window, operand 1, single buffered']
    #allocation6 [shape = 's32[1]{0}', space=sflag, size = 0x4, scoped, tag = 'scoped memory for tpu_custom_call.1']
    #allocation7 [shape = 'u8[8192]{0}', space=vmem, size = 0x2000, scoped, tag = 'input window, operand 2, single buffered']
    #allocation8 [shape = 'u8[512]{0}', space=vmem, size = 0x400, scoped, tag = 'input window, operand 3, single buffered']
    #allocation9 [shape = 's32[1]{0}', space=sflag, size = 0x4, scoped, tag = 'scoped memory for tpu_custom_call.1']
    #allocation10 [shape = 'u8[8192]{0}', space=vmem, size = 0x2000, scoped, tag = 'output window, operand 0']
    %9 = vsyncpa [#allocation3], 0
    %s10 = scalar_lea.sflag [#allocation3], 1
    %11 = vsyncpa %s10, 0
    %12 = vsyncpa [#allocation6], 0
    %13 = vsyncpa [#allocation9], 0
    %14 = vsyncpa [#allocation4], 0
    %s15 = scalar_lea.sflag [#allocation4], 1
    %16 = vsyncpa %s15, 0
    loop: start=0, step=1, limit=4
    $region2: #{tpu_custom_call.1} parent=1 // loop_pre_header
      _
    $region3: #{tpu_custom_call.1} parent=1 // loop_header
      %s18 = sphi 0, %s22
      %p19 = scmp.ge.s32.totalorder %s18, 4
      %s28 = sphi 0, %s30
      %s31 = sphi 0, %s28
      %s32 = sphi 0, %s31
      %s48 = sphi 0, %s32
      %s52 = sphi 0, %s52
      %s54 = sphi 0, %s52
      %s55 = sphi 0, %s54
      %s69 = sphi 0, %s55
      %s73 = sphi 0, %s73
      %s75 = sphi 0, %s73
      %s76 = sphi 0, %s75
      %s90 = sphi 0, %s76
      %s94 = sphi 0, %s94
      %s96 = sphi 0, %s94
      %s97 = sphi 0, %s96
      %s111 = sphi 0, %s97
      %s117 = sphi 0, %s119
      %s120 = sphi 0, %s117
      %s121 = sphi 0, %s120
      %s137 = sphi 0, %s121
    $region4: #{tpu_custom_call.1} parent=1 // loop_header_branch
      %21 = sbr.rel (%p19) target = $region8
    $region5: #{tpu_custom_call.1} parent=1 // loop_body
      %s23 = ssub.s32 %s18, 1
      %s24 = ssub.s32 %s18, 2
      %s25 = sadd.s32 %s18, 1
      %s26 = ssub.s32 %s18, %s25
      %p27 = scmp.eq.s32.totalorder %s26, 0
      %s29 = sadd.s32 %s28, 1
      %s30 = scalar_select %p27, %s28, %s29
      %p33 = pneg %p27
      %p34 = scmp.eq.s32.totalorder %s18, 1
      %p35 = por %p33, %p34
      %p36 = scmp.ne.s32.totalorder %s28, %s31
      %p37 = scmp.eq.s32.totalorder %s18, 0
      %p38 = por %p36, %p37
      %p39 = scmp.ne.s32.totalorder %s28, %s31
      %p40 = scmp.eq.s32.totalorder %s23, 1
      %p41 = por %p39, %p40
      %p42 = scmp.ne.s32.totalorder %s31, %s32
      %p43 = scmp.eq.s32.totalorder %s23, 0
      %p44 = por %p42, %p43
      %p45 = scmp.ne.s32.totalorder %s31, %s32
      %p46 = scmp.eq.s32.totalorder %s24, 1
      %p47 = por %p45, %p46
      %p49 = scmp.ne.s32.totalorder %s32, %s48
      %p50 = scmp.eq.s32.totalorder %s24, 0
      %p51 = por %p49, %p50
      %s53 = sadd.s32 %s52, 1
      %p56 = scmp.eq.s32.totalorder %s18, 1
      %p57 = scmp.ne.s32.totalorder %s52, %s54
      %p58 = scmp.eq.s32.totalorder %s18, 0
      %p59 = por %p57, %p58
      %p60 = scmp.ne.s32.totalorder %s52, %s54
      %p61 = scmp.eq.s32.totalorder %s23, 1
      %p62 = por %p60, %p61
      %p63 = scmp.ne.s32.totalorder %s54, %s55
      %p64 = scmp.eq.s32.totalorder %s23, 0
      %p65 = por %p63, %p64
      %p66 = scmp.ne.s32.totalorder %s54, %s55
      %p67 = scmp.eq.s32.totalorder %s24, 1
      %p68 = por %p66, %p67
      %p70 = scmp.ne.s32.totalorder %s55, %s69
      %p71 = scmp.eq.s32.totalorder %s24, 0
      %p72 = por %p70, %p71
      %s74 = sadd.s32 %s73, 1
      %p77 = scmp.eq.s32.totalorder %s18, 1
      %p78 = scmp.ne.s32.totalorder %s73, %s75
      %p79 = scmp.eq.s32.totalorder %s18, 0
      %p80 = por %p78, %p79
      %p81 = scmp.ne.s32.totalorder %s73, %s75
      %p82 = scmp.eq.s32.totalorder %s23, 1
      %p83 = por %p81, %p82
      %p84 = scmp.ne.s32.totalorder %s75, %s76
      %p85 = scmp.eq.s32.totalorder %s23, 0
      %p86 = por %p84, %p85
      %p87 = scmp.ne.s32.totalorder %s75, %s76
      %p88 = scmp.eq.s32.totalorder %s24, 1
      %p89 = por %p87, %p88
      %p91 = scmp.ne.s32.totalorder %s76, %s90
      %p92 = scmp.eq.s32.totalorder %s24, 0
      %p93 = por %p91, %p92
      %s95 = sadd.s32 %s94, 1
      %p98 = scmp.eq.s32.totalorder %s18, 1
      %p99 = scmp.ne.s32.totalorder %s94, %s96
      %p100 = scmp.eq.s32.totalorder %s18, 0
      %p101 = por %p99, %p100
      %p102 = scmp.ne.s32.totalorder %s94, %s96
      %p103 = scmp.eq.s32.totalorder %s23, 1
      %p104 = por %p102, %p103
      %p105 = scmp.ne.s32.totalorder %s96, %s97
      %p106 = scmp.eq.s32.totalorder %s23, 0
      %p107 = por %p105, %p106
      %p108 = scmp.ne.s32.totalorder %s96, %s97
      %p109 = scmp.eq.s32.totalorder %s24, 1
      %p110 = por %p108, %p109
      %p112 = scmp.ne.s32.totalorder %s97, %s111
      %p113 = scmp.eq.s32.totalorder %s24, 0
      %p114 = por %p112, %p113
      %s115 = ssub.s32 %s18, %s25
      %p116 = scmp.eq.s32.totalorder %s115, 0
      %s118 = sadd.s32 %s117, 1
      %s119 = scalar_select %p116, %s117, %s118
      %p122 = pneg %p116
      %p123 = scmp.eq.s32.totalorder %s18, 1
      %p124 = por %p122, %p123
      %p125 = scmp.ne.s32.totalorder %s117, %s120
      %p126 = scmp.eq.s32.totalorder %s18, 0
      %p127 = por %p125, %p126
      %p128 = scmp.ne.s32.totalorder %s117, %s120
      %p129 = scmp.eq.s32.totalorder %s23, 1
      %p130 = por %p128, %p129
      %p131 = scmp.ne.s32.totalorder %s120, %s121
      %p132 = scmp.eq.s32.totalorder %s23, 0
      %p133 = por %p131, %p132
      %p134 = scmp.ne.s32.totalorder %s120, %s121
      %p135 = scmp.eq.s32.totalorder %s24, 1
      %p136 = por %p134, %p135
      %p138 = scmp.ne.s32.totalorder %s121, %s137
      %p139 = scmp.eq.s32.totalorder %s24, 0
      %p140 = por %p138, %p139
      %p141 = scmp.le.s32.totalorder 1, %s18
      %p142 = scmp.lt.s32.totalorder %s18, 3
      %p143 = pnand %p141, %p142
      %p144 = pneg %p143
      // Predicated region
      $region9: #{tpu_custom_call.1} parent=5 // pred_check
        _
      $region10: #{tpu_custom_call.1} parent=5 // pred_check_branch
        %146 = sbr.rel (%p143) target = $region12
      $region11: #{tpu_custom_call.1} parent=5 // pred_region
        %s147 = ssub.s32 %s18, 1
        // Predicated region
        $region13: #{tpu_custom_call.1} parent=11 // pred_check
          %p148 = pneg %p65
        $region14: #{tpu_custom_call.1} parent=11 // pred_check_branch
          %150 = sbr.rel (%p148) target = $region16
        $region15: #{tpu_custom_call.1} parent=11 // pred_region
          %s152 = ssub.s32 256, 256
          %153 = vsyncadd [#allocation6], %s152
          %s154 = sshll.u32 [#allocation5], 4
          %s155 = int_to_ptr.vmem [resolvable:$true] %s154
          %160 = dma.hbm_to_vmem [thread:$0]  %s1, 256, %s155, [#allocation6], 64, 64, 4
        $region16: #{tpu_custom_call.1} parent=11 // pred_fallthru
          _
        // Predicated region
        $region17: #{tpu_custom_call.1} parent=11 // pred_check
          %p161 = pneg %p86
        $region18: #{tpu_custom_call.1} parent=11 // pred_check_branch
          %163 = sbr.rel (%p161) target = $region20
        $region19: #{tpu_custom_call.1} parent=11 // pred_region
          %s165 = ssub.s32 256, 256
          %166 = vsyncadd [#allocation6], %s165
          %s167 = sshll.u32 [#allocation7], 4
          %s168 = int_to_ptr.vmem [resolvable:$true] %s167
          %173 = dma.hbm_to_vmem [thread:$0]  %s2, 256, %s168, [#allocation6], 64, 64, 4
        $region20: #{tpu_custom_call.1} parent=11 // pred_fallthru
          _
        // Predicated region
        $region21: #{tpu_custom_call.1} parent=11 // pred_check
          %p174 = pneg %p107
        $region22: #{tpu_custom_call.1} parent=11 // pred_check_branch
          %176 = sbr.rel (%p174) target = $region24
        $region23: #{tpu_custom_call.1} parent=11 // pred_region
          %s178 = ssub.s32 16, 16
          %179 = vsyncadd [#allocation9], %s178
          %s181 = sshll.u32 [#allocation8], 4
          %s182 = int_to_ptr.vmem [resolvable:$true] %s181
          %184 = dma.hbm_to_vmem [thread:$0]  %s3, 16, %s182, [#allocation9]
        $region24: #{tpu_custom_call.1} parent=11 // pred_fallthru
          _
      $region12: #{tpu_custom_call.1} parent=5 // pred_fallthru
        _
      %p185 = scmp.lt.s32.totalorder %s18, 2
      // Predicated region
      $region25: #{tpu_custom_call.1} parent=5 // pred_check
        %p186 = pneg %p185
      $region26: #{tpu_custom_call.1} parent=5 // pred_check_branch
        %188 = sbr.rel (%p186) target = $region28
      $region27: #{tpu_custom_call.1} parent=5 // pred_region
        // Predicated region
        $region29: #{tpu_custom_call.1} parent=27 // pred_check
          %p189 = pneg %p38
        $region30: #{tpu_custom_call.1} parent=27 // pred_check_branch
          %191 = sbr.rel (%p189) target = $region32
        $region31: #{tpu_custom_call.1} parent=27 // pred_region
          %s192 = sand.u32 %s28, 1
          %s193 = scalar_lea.sflag [#allocation3], %s192
          %s194 = sand.u32 %s28, 1
          %s195 = smul.addr %s194, 4
          %s196 = scalar_lea.vmem [#allocation2], %s195
          %s198 = ssub.s32 64, 64
          %199 = vsyncadd %s193, %s198
          %s200 = smul.addr %s18, 64
          %s201 = scalar_lea.hbm %s0, %s200
          %s203 = sshll.u32 %s196, 4
          %s204 = int_to_ptr.vmem [resolvable:$true] %s203
          %206 = dma.hbm_to_vmem [thread:$0]  %s201, 64, %s204, %s193
        $region32: #{tpu_custom_call.1} parent=27 // pred_fallthru
          _
      $region28: #{tpu_custom_call.1} parent=5 // pred_fallthru
        _
      %p207 = scmp.le.s32.totalorder 1, %s18
      %p208 = scmp.lt.s32.totalorder %s18, 3
      %p209 = pnand %p207, %p208
      %p210 = pneg %p209
      // Predicated region
      $region33: #{tpu_custom_call.1} parent=5 // pred_check
        _
      $region34: #{tpu_custom_call.1} parent=5 // pred_check_branch
        %212 = sbr.rel (%p209) target = $region36
      $region35: #{tpu_custom_call.1} parent=5 // pred_region
        %s213 = ssub.s32 %s18, 1
        %s214 = sand.u32 %s31, 1
        %s215 = scalar_lea.sflag [#allocation3], %s214
        %s216 = sand.u32 %s31, 1
        %s217 = smul.addr %s216, 4
        %s218 = scalar_lea.vmem [#allocation2], %s217
        // Predicated region
        $region37: #{tpu_custom_call.1} parent=35 // pred_check
          %p219 = pneg %p44
        $region38: #{tpu_custom_call.1} parent=35 // pred_check_branch
          %221 = sbr.rel (%p219) target = $region40
        $region39: #{tpu_custom_call.1} parent=35 // pred_region
          %222 = dma.done %s215, 64
        $region40: #{tpu_custom_call.1} parent=35 // pred_fallthru
          _
        // Predicated region
        $region41: #{tpu_custom_call.1} parent=35 // pred_check
          %p223 = pneg %p65
        $region42: #{tpu_custom_call.1} parent=35 // pred_check_branch
          %225 = sbr.rel (%p223) target = $region44
        $region43: #{tpu_custom_call.1} parent=35 // pred_region
          %226 = dma.done [#allocation6], 256
        $region44: #{tpu_custom_call.1} parent=35 // pred_fallthru
          _
        // Predicated region
        $region45: #{tpu_custom_call.1} parent=35 // pred_check
          %p227 = pneg %p86
        $region46: #{tpu_custom_call.1} parent=35 // pred_check_branch
          %229 = sbr.rel (%p227) target = $region48
        $region47: #{tpu_custom_call.1} parent=35 // pred_region
          %230 = dma.done [#allocation6], 256
        $region48: #{tpu_custom_call.1} parent=35 // pred_fallthru
          _
        // Predicated region
        $region49: #{tpu_custom_call.1} parent=35 // pred_check
          %p231 = pneg %p107
        $region50: #{tpu_custom_call.1} parent=35 // pred_check_branch
          %233 = sbr.rel (%p231) target = $region52
        $region51: #{tpu_custom_call.1} parent=35 // pred_region
          %234 = dma.done [#allocation9], 16
        $region52: #{tpu_custom_call.1} parent=35 // pred_fallthru
          _
        %s235 = sand.u32 %s31, 1
        %s236 = scalar_lea.sflag [#allocation3], %s235
        %s237 = sand.u32 %s31, 1
        %s238 = smul.addr %s237, 4
        %s239 = scalar_lea.vmem [#allocation2], %s238
        %p240 = pneg %p44
        %p241 = pneg %p41
        %p242 = pneg %p65
        %p243 = pneg %p62
        %p244 = pneg %p86
        %p245 = pneg %p83
        %p246 = pneg %p107
        %p247 = pneg %p104
        %p248 = pneg %p133
        %p249 = pneg %p130
        %s250 = sand.u32 %s120, 1
        %s251 = scalar_lea.sflag [#allocation4], %s250
        %s252 = sand.u32 %s120, 1
        %s253 = smul.addr %s252, 8
        %s254 = scalar_lea.vmem [#allocation10], %s253
        %v256 = vld [vmem:[%s218] sm:$0xf]
        %v257 = vld [vmem:[#allocation5] sm:$0xf]
        %v258 = vld [vmem:[#allocation5 + $0x4] sm:$0xf]
        %v259 = vld [vmem:[#allocation5 + $0x8] sm:$0xf]
        %v260 = vld [vmem:[#allocation5 + $0xc] sm:$0xf]
        %v265 = vunpack.c.l.b16 %v257
        %v266 = vunpack.c.l.b16 %v258
        %v267 = vunpack.c.l.b16 %v259
        %v268 = vunpack.c.l.b16 %v260
        %v269 = vpack.c.b16 %v266, %v265
        %v270 = vpack.c.b16 %v268, %v267
        %vm273 = vcmask 261120
        %v275 = vsel %vm273, %v256, 0
        %277 = vmatprep.subr.bf16.mxu0 0
        %278 = vmatpush1.bf16.msra.mxu0 %v269
        %279 = vmatprep.subr.bf16.mxu0 0
        %280 = vmatpush1.bf16.msra.mxu0 %v270
        %281 = vmatprep.subr.bf16.mxu0 0
        %282 = vmatpush1.bf16.msra.mxu0 0
        %283 = vmatprep.subr.bf16.mxu0 0
        %284 = vmatpush1.bf16.msra.mxu0 0
        %285 = vmatprep.subr.bf16.mxu0 0
        %286 = vmatpush1.bf16.msra.mxu0 0
        %287 = vmatprep.subr.bf16.mxu0 0
        %288 = vmatpush1.bf16.msra.mxu0 0
        %289 = vmatprep.subr.bf16.mxu0 0
        %290 = vmatpush1.bf16.msra.mxu0 0
        %291 = vmatprep.subr.bf16.mxu0 0
        %292 = vmatpush1.bf16.msra.mxu0 0
        %293 = vmatprep.subr.bf16.mxu0 0
        %294 = vmatpush1.bf16.msra.mxu0 0
        %295 = vmatprep.subr.bf16.mxu0 0
        %296 = vmatpush1.bf16.msra.mxu0 0
        %297 = vmatprep.subr.bf16.mxu0 0
        %298 = vmatpush1.bf16.msra.mxu0 0
        %299 = vmatprep.subr.bf16.mxu0 0
        %300 = vmatpush1.bf16.msra.mxu0 0
        %301 = vmatprep.subr.bf16.mxu0 0
        %302 = vmatpush1.bf16.msra.mxu0 0
        %303 = vmatprep.subr.bf16.mxu0 0
        %304 = vmatpush1.bf16.msra.mxu0 0
        %305 = vmatprep.subr.bf16.mxu0 0
        %306 = vmatpush1.bf16.msra.mxu0 0
        %307 = vmatprep.subr.bf16.mxu0 0
        %308 = vmatpush1.bf16.msra.mxu0 0
        %309 = vmatprep.mubr.bf16.mxu0 0
        %310 = vmatmul.mubr.bf16.gmra.mrb[0].mxu0 %v275
        %v311 = vpop.f32.mrb[0].mxu0
        %v312 = vadd.f32 0.0, %v311
        %v313 = vpop.f32.mrb[0].mxu0
        %v314 = vpop.f32.mrb[0].mxu0
        %v315 = vpop.f32.mrb[0].mxu0
        %316 = vdwg.mxu0
        %v317 = vlaneseq
        %v318 = vshrl.u32 %v317, 7
        %v319 = vlaneseq
        %v320 = vand.u32 %v319, 127
        %vm321 = vcmp.le.s32.totalorder %v320, %v318
        %v322 = vpack.c.bf16 %v312, %v312
        %324 = vrot.lane.b32.xlu0 %v322, 96
        %v325 = vpop.permute.xlu0 %324
        %vm326 = vcmask 64512
        %v328 = vsel %vm326, %v322, 0
        %v331 = vsel %vm326, %v325, 0
        %333 = vmatprep.subr.bf16.mxu0 0
        %334 = vmatpush1.bf16.xpose.msra.mxu0 %v331
        %335 = vmatprep.subr.bf16.mxu0 0
        %336 = vmatpush1.bf16.xpose.msra.mxu0 0
        %337 = vmatprep.subr.bf16.mxu0 0
        %338 = vmatpush1.bf16.xpose.msra.mxu0 0
        %339 = vmatprep.subr.bf16.mxu0 0
        %340 = vmatpush1.bf16.xpose.msra.mxu0 0
        %341 = vmatprep.subr.bf16.mxu0 0
        %342 = vmatpush1.bf16.xpose.msra.mxu0 0
        %343 = vmatprep.subr.bf16.mxu0 0
        %344 = vmatpush1.bf16.xpose.msra.mxu0 0
        %345 = vmatprep.subr.bf16.mxu0 0
        %346 = vmatpush1.bf16.xpose.msra.mxu0 0
        %347 = vmatprep.subr.bf16.mxu0 0
        %348 = vmatpush1.bf16.xpose.msra.mxu0 0
        %349 = vmatprep.subr.bf16.mxu0 0
        %350 = vmatpush1.bf16.xpose.msra.mxu0 0
        %351 = vmatprep.subr.bf16.mxu0 0
        %352 = vmatpush1.bf16.xpose.msra.mxu0 0
        %353 = vmatprep.subr.bf16.mxu0 0
        %354 = vmatpush1.bf16.xpose.msra.mxu0 0
        %355 = vmatprep.subr.bf16.mxu0 0
        %356 = vmatpush1.bf16.xpose.msra.mxu0 0
        %357 = vmatprep.subr.bf16.mxu0 0
        %358 = vmatpush1.bf16.xpose.msra.mxu0 0
        %359 = vmatprep.subr.bf16.mxu0 0
        %360 = vmatpush1.bf16.xpose.msra.mxu0 0
        %361 = vmatprep.subr.bf16.mxu0 0
        %362 = vmatpush1.bf16.xpose.msra.mxu0 0
        %363 = vmatprep.subr.bf16.mxu0 0
        %364 = vmatpush1.bf16.xpose.msra.mxu0 0
        %365 = vmatprep.mubr.bf16.mxu0 0
        %366 = vmatmul.mubr.bf16.gmra.mrb[0].mxu0 %v328
        %v367 = vpop.f32.mrb[0].mxu0
        %v368 = vadd.f32 0.0, %v367
        %v369 = vpop.f32.mrb[0].mxu0
        %v370 = vpop.f32.mrb[0].mxu0
        %v371 = vpop.f32.mrb[0].mxu0
        %372 = vdwg.mxu0
        %v373 = vsel %vm321, %v368, -1e+30
        %v374 = vsel %vm326, %v373, -inf
        %375 = vmax.xlane.f32.xlu0 %v374
        %v376 = vpop.xlane.xlu0 %375
        %v377 = vsub.f32 %v373, %v376
        %v378 = vmul.f32 %v377, 1.442695
        %v379 = vpow.pop %v378
        %v380 = vsel %vm326, %v379, 0.0
        %381 = vadd.xlane.f32.xlu0 %v380
        %v382 = vpop.xlane.xlu0 %381
        %v383 = vrcp.pop %v382
        %v384 = vmul.f32 %v379, %v383
        %v385 = vpack.c.bf16 %v384, %v384
        %386 = vrot.lane.b32.xlu0 %v322, 64
        %v387 = vpop.permute.xlu0 %386
        %v389 = vsel %vm326, %v385, 0
        %vm391 = vcmask 1043456
        %v393 = vsel %vm391, %v387, 0
        %395 = vmatprep.subr.bf16.mxu0 0
        %396 = vmatpush1.bf16.msra.mxu0 %v393
        %397 = vmatprep.subr.bf16.mxu0 0
        %398 = vmatpush1.bf16.msra.mxu0 0
        %399 = vmatprep.subr.bf16.mxu0 0
        %400 = vmatpush1.bf16.msra.mxu0 0
        %401 = vmatprep.subr.bf16.mxu0 0
        %402 = vmatpush1.bf16.msra.mxu0 0
        %403 = vmatprep.subr.bf16.mxu0 0
        %404 = vmatpush1.bf16.msra.mxu0 0
        %405 = vmatprep.subr.bf16.mxu0 0
        %406 = vmatpush1.bf16.msra.mxu0 0
        %407 = vmatprep.subr.bf16.mxu0 0
        %408 = vmatpush1.bf16.msra.mxu0 0
        %409 = vmatprep.subr.bf16.mxu0 0
        %410 = vmatpush1.bf16.msra.mxu0 0
        %411 = vmatprep.subr.bf16.mxu0 0
        %412 = vmatpush1.bf16.msra.mxu0 0
        %413 = vmatprep.subr.bf16.mxu0 0
        %414 = vmatpush1.bf16.msra.mxu0 0
        %415 = vmatprep.subr.bf16.mxu0 0
        %416 = vmatpush1.bf16.msra.mxu0 0
        %417 = vmatprep.subr.bf16.mxu0 0
        %418 = vmatpush1.bf16.msra.mxu0 0
        %419 = vmatprep.subr.bf16.mxu0 0
        %420 = vmatpush1.bf16.msra.mxu0 0
        %421 = vmatprep.subr.bf16.mxu0 0
        %422 = vmatpush1.bf16.msra.mxu0 0
        %423 = vmatprep.subr.bf16.mxu0 0
        %424 = vmatpush1.bf16.msra.mxu0 0
        %425 = vmatprep.subr.bf16.mxu0 0
        %426 = vmatpush1.bf16.msra.mxu0 0
        %427 = vmatprep.mubr.bf16.mxu0 0
        %428 = vmatmul.mubr.bf16.gmra.mrb[0].mxu0 %v389
        %v429 = vpop.f32.mrb[0].mxu0
        %v430 = vadd.f32 0.0, %v429
        %v431 = vpop.f32.mrb[0].mxu0
        %v432 = vpop.f32.mrb[0].mxu0
        %v433 = vpop.f32.mrb[0].mxu0
        %434 = vdwg.mxu0
        %435 = vrot.lane.b32.xlu0 %v322, 120
        %v436 = vpop.permute.xlu0 %435
        %437 = vrot.lane.b32.xlu0 %v322, 88
        %v438 = vpop.permute.xlu0 %437
        %v440 = vsel %vm326, %v436, 0
        %v443 = vsel %vm326, %v438, 0
        %445 = vmatprep.subr.bf16.mxu0 0
        %446 = vmatpush1.bf16.xpose.msra.mxu0 %v443
        %447 = vmatprep.subr.bf16.mxu0 0
        %448 = vmatpush1.bf16.xpose.msra.mxu0 0
        %449 = vmatprep.subr.bf16.mxu0 0
        %450 = vmatpush1.bf16.xpose.msra.mxu0 0
        %451 = vmatprep.subr.bf16.mxu0 0
        %452 = vmatpush1.bf16.xpose.msra.mxu0 0
        %453 = vmatprep.subr.bf16.mxu0 0
        %454 = vmatpush1.bf16.xpose.msra.mxu0 0
        %455 = vmatprep.subr.bf16.mxu0 0
        %456 = vmatpush1.bf16.xpose.msra.mxu0 0
        %457 = vmatprep.subr.bf16.mxu0 0
        %458 = vmatpush1.bf16.xpose.msra.mxu0 0
        %459 = vmatprep.subr.bf16.mxu0 0
        %460 = vmatpush1.bf16.xpose.msra.mxu0 0
        %461 = vmatprep.subr.bf16.mxu0 0
        %462 = vmatpush1.bf16.xpose.msra.mxu0 0
        %463 = vmatprep.subr.bf16.mxu0 0
        %464 = vmatpush1.bf16.xpose.msra.mxu0 0
        %465 = vmatprep.subr.bf16.mxu0 0
        %466 = vmatpush1.bf16.xpose.msra.mxu0 0
        %467 = vmatprep.subr.bf16.mxu0 0
        %468 = vmatpush1.bf16.xpose.msra.mxu0 0
        %469 = vmatprep.subr.bf16.mxu0 0
        %470 = vmatpush1.bf16.xpose.msra.mxu0 0
        %471 = vmatprep.subr.bf16.mxu0 0
        %472 = vmatpush1.bf16.xpose.msra.mxu0 0
        %473 = vmatprep.subr.bf16.mxu0 0
        %474 = vmatpush1.bf16.xpose.msra.mxu0 0
        %475 = vmatprep.subr.bf16.mxu0 0
        %476 = vmatpush1.bf16.xpose.msra.mxu0 0
        %477 = vmatprep.mubr.bf16.mxu0 0
        %478 = vmatmul.mubr.bf16.gmra.mrb[0].mxu0 %v440
        %v479 = vpop.f32.mrb[0].mxu0
        %v480 = vadd.f32 0.0, %v479
        %v481 = vpop.f32.mrb[0].mxu0
        %v482 = vpop.f32.mrb[0].mxu0
        %v483 = vpop.f32.mrb[0].mxu0
        %484 = vdwg.mxu0
        %v485 = vsel %vm321, %v480, -1e+30
        %v486 = vsel %vm326, %v485, -inf
        %487 = vmax.xlane.f32.xlu0 %v486
        %v488 = vpop.xlane.xlu0 %487
        %v489 = vsub.f32 %v485, %v488
        %v490 = vmul.f32 %v489, 1.442695
        %v491 = vpow.pop %v490
        %v492 = vsel %vm326, %v491, 0.0
        %493 = vadd.xlane.f32.xlu0 %v492
        %v494 = vpop.xlane.xlu0 %493
        %v495 = vrcp.pop %v494
        %v496 = vmul.f32 %v491, %v495
        %v497 = vpack.c.bf16 %v496, %v496
        %498 = vrot.lane.b32.xlu0 %v322, 56
        %v499 = vpop.permute.xlu0 %498
        %v501 = vsel %vm326, %v497, 0
        %v504 = vsel %vm391, %v499, 0
        %506 = vmatprep.subr.bf16.mxu0 0
        %507 = vmatpush1.bf16.msra.mxu0 %v504
        %508 = vmatprep.subr.bf16.mxu0 0
        %509 = vmatpush1.bf16.msra.mxu0 0
        %510 = vmatprep.subr.bf16.mxu0 0
        %511 = vmatpush1.bf16.msra.mxu0 0
        %512 = vmatprep.subr.bf16.mxu0 0
        %513 = vmatpush1.bf16.msra.mxu0 0
        %514 = vmatprep.subr.bf16.mxu0 0
        %515 = vmatpush1.bf16.msra.mxu0 0
        %516 = vmatprep.subr.bf16.mxu0 0
        %517 = vmatpush1.bf16.msra.mxu0 0
        %518 = vmatprep.subr.bf16.mxu0 0
        %519 = vmatpush1.bf16.msra.mxu0 0
        %520 = vmatprep.subr.bf16.mxu0 0
        %521 = vmatpush1.bf16.msra.mxu0 0
        %522 = vmatprep.subr.bf16.mxu0 0
        %523 = vmatpush1.bf16.msra.mxu0 0
        %524 = vmatprep.subr.bf16.mxu0 0
        %525 = vmatpush1.bf16.msra.mxu0 0
        %526 = vmatprep.subr.bf16.mxu0 0
        %527 = vmatpush1.bf16.msra.mxu0 0
        %528 = vmatprep.subr.bf16.mxu0 0
        %529 = vmatpush1.bf16.msra.mxu0 0
        %530 = vmatprep.subr.bf16.mxu0 0
        %531 = vmatpush1.bf16.msra.mxu0 0
        %532 = vmatprep.subr.bf16.mxu0 0
        %533 = vmatpush1.bf16.msra.mxu0 0
        %534 = vmatprep.subr.bf16.mxu0 0
        %535 = vmatpush1.bf16.msra.mxu0 0
        %536 = vmatprep.subr.bf16.mxu0 0
        %537 = vmatpush1.bf16.msra.mxu0 0
        %538 = vmatprep.mubr.bf16.mxu0 0
        %539 = vmatmul.mubr.bf16.gmra.mrb[0].mxu0 %v501
        %v540 = vpop.f32.mrb[0].mxu0
        %v541 = vadd.f32 0.0, %v540
        %v542 = vpop.f32.mrb[0].mxu0
        %v543 = vpop.f32.mrb[0].mxu0
        %v544 = vpop.f32.mrb[0].mxu0
        %545 = vdwg.mxu0
        %546 = vrot.lane.b32.xlu0 %v322, 112
        %v547 = vpop.permute.xlu0 %546
        %548 = vrot.lane.b32.xlu0 %v322, 80
        %v549 = vpop.permute.xlu0 %548
        %v551 = vsel %vm326, %v547, 0
        %v554 = vsel %vm326, %v549, 0
        %556 = vmatprep.subr.bf16.mxu0 0
        %557 = vmatpush1.bf16.xpose.msra.mxu0 %v554
        %558 = vmatprep.subr.bf16.mxu0 0
        %559 = vmatpush1.bf16.xpose.msra.mxu0 0
        %560 = vmatprep.subr.bf16.mxu0 0
        %561 = vmatpush1.bf16.xpose.msra.mxu0 0
        %562 = vmatprep.subr.bf16.mxu0 0
        %563 = vmatpush1.bf16.xpose.msra.mxu0 0
        %564 = vmatprep.subr.bf16.mxu0 0
        %565 = vmatpush1.bf16.xpose.msra.mxu0 0
        %566 = vmatprep.subr.bf16.mxu0 0
        %567 = vmatpush1.bf16.xpose.msra.mxu0 0
        %568 = vmatprep.subr.bf16.mxu0 0
        %569 = vmatpush1.bf16.xpose.msra.mxu0 0
        %570 = vmatprep.subr.bf16.mxu0 0
        %571 = vmatpush1.bf16.xpose.msra.mxu0 0
        %572 = vmatprep.subr.bf16.mxu0 0
        %573 = vmatpush1.bf16.xpose.msra.mxu0 0
        %574 = vmatprep.subr.bf16.mxu0 0
        %575 = vmatpush1.bf16.xpose.msra.mxu0 0
        %576 = vmatprep.subr.bf16.mxu0 0
        %577 = vmatpush1.bf16.xpose.msra.mxu0 0
        %578 = vmatprep.subr.bf16.mxu0 0
        %579 = vmatpush1.bf16.xpose.msra.mxu0 0
        %580 = vmatprep.subr.bf16.mxu0 0
        %581 = vmatpush1.bf16.xpose.msra.mxu0 0
        %582 = vmatprep.subr.bf16.mxu0 0
        %583 = vmatpush1.bf16.xpose.msra.mxu0 0
        %584 = vmatprep.subr.bf16.mxu0 0
        %585 = vmatpush1.bf16.xpose.msra.mxu0 0
        %586 = vmatprep.subr.bf16.mxu0 0
        %587 = vmatpush1.bf16.xpose.msra.mxu0 0
        %588 = vmatprep.mubr.bf16.mxu0 0
        %589 = vmatmul.mubr.bf16.gmra.mrb[0].mxu0 %v551
        %v590 = vpop.f32.mrb[0].mxu0
        %v591 = vadd.f32 0.0, %v590
        %v592 = vpop.f32.mrb[0].mxu0
        %v593 = vpop.f32.mrb[0].mxu0
        %v594 = vpop.f32.mrb[0].mxu0
        %595 = vdwg.mxu0
        %v596 = vsel %vm321, %v591, -1e+30
        %v597 = vsel %vm326, %v596, -inf
        %598 = vmax.xlane.f32.xlu0 %v597
        %v599 = vpop.xlane.xlu0 %598
        %v600 = vsub.f32 %v596, %v599
        %v601 = vmul.f32 %v600, 1.442695
        %v602 = vpow.pop %v601
        %v603 = vsel %vm326, %v602, 0.0
        %604 = vadd.xlane.f32.xlu0 %v603
        %v605 = vpop.xlane.xlu0 %604
        %v606 = vrcp.pop %v605
        %v607 = vmul.f32 %v602, %v606
        %v608 = vpack.c.bf16 %v607, %v607
        %609 = vrot.lane.b32.xlu0 %v322, 48
        %v610 = vpop.permute.xlu0 %609
        %v612 = vsel %vm326, %v608, 0
        %v615 = vsel %vm391, %v610, 0
        %617 = vmatprep.subr.bf16.mxu0 0
        %618 = vmatpush1.bf16.msra.mxu0 %v615
        %619 = vmatprep.subr.bf16.mxu0 0
        %620 = vmatpush1.bf16.msra.mxu0 0
        %621 = vmatprep.subr.bf16.mxu0 0
        %622 = vmatpush1.bf16.msra.mxu0 0
        %623 = vmatprep.subr.bf16.mxu0 0
        %624 = vmatpush1.bf16.msra.mxu0 0
        %625 = vmatprep.subr.bf16.mxu0 0
        %626 = vmatpush1.bf16.msra.mxu0 0
        %627 = vmatprep.subr.bf16.mxu0 0
        %628 = vmatpush1.bf16.msra.mxu0 0
        %629 = vmatprep.subr.bf16.mxu0 0
        %630 = vmatpush1.bf16.msra.mxu0 0
        %631 = vmatprep.subr.bf16.mxu0 0
        %632 = vmatpush1.bf16.msra.mxu0 0
        %633 = vmatprep.subr.bf16.mxu0 0
        %634 = vmatpush1.bf16.msra.mxu0 0
        %635 = vmatprep.subr.bf16.mxu0 0
        %636 = vmatpush1.bf16.msra.mxu0 0
        %637 = vmatprep.subr.bf16.mxu0 0
        %638 = vmatpush1.bf16.msra.mxu0 0
        %639 = vmatprep.subr.bf16.mxu0 0
        %640 = vmatpush1.bf16.msra.mxu0 0
        %641 = vmatprep.subr.bf16.mxu0 0
        %642 = vmatpush1.bf16.msra.mxu0 0
        %643 = vmatprep.subr.bf16.mxu0 0
        %644 = vmatpush1.bf16.msra.mxu0 0
        %645 = vmatprep.subr.bf16.mxu0 0
        %646 = vmatpush1.bf16.msra.mxu0 0
        %647 = vmatprep.subr.bf16.mxu0 0
        %648 = vmatpush1.bf16.msra.mxu0 0
        %649 = vmatprep.mubr.bf16.mxu0 0
        %650 = vmatmul.mubr.bf16.gmra.mrb[0].mxu0 %v612
        %v651 = vpop.f32.mrb[0].mxu0
        %v652 = vadd.f32 0.0, %v651
        %v653 = vpop.f32.mrb[0].mxu0
        %v654 = vpop.f32.mrb[0].mxu0
        %v655 = vpop.f32.mrb[0].mxu0
        %656 = vdwg.mxu0
        %657 = vrot.lane.b32.xlu0 %v322, 104
        %v658 = vpop.permute.xlu0 %657
        %659 = vrot.lane.b32.xlu0 %v322, 72
        %v660 = vpop.permute.xlu0 %659
        %v662 = vsel %vm326, %v658, 0
        %v665 = vsel %vm326, %v660, 0
        %667 = vmatprep.subr.bf16.mxu0 0
        %668 = vmatpush1.bf16.xpose.msra.mxu0 %v665
        %669 = vmatprep.subr.bf16.mxu0 0
        %670 = vmatpush1.bf16.xpose.msra.mxu0 0
        %671 = vmatprep.subr.bf16.mxu0 0
        %672 = vmatpush1.bf16.xpose.msra.mxu0 0
        %673 = vmatprep.subr.bf16.mxu0 0
        %674 = vmatpush1.bf16.xpose.msra.mxu0 0
        %675 = vmatprep.subr.bf16.mxu0 0
        %676 = vmatpush1.bf16.xpose.msra.mxu0 0
        %677 = vmatprep.subr.bf16.mxu0 0
        %678 = vmatpush1.bf16.xpose.msra.mxu0 0
        %679 = vmatprep.subr.bf16.mxu0 0
        %680 = vmatpush1.bf16.xpose.msra.mxu0 0
        %681 = vmatprep.subr.bf16.mxu0 0
        %682 = vmatpush1.bf16.xpose.msra.mxu0 0
        %683 = vmatprep.subr.bf16.mxu0 0
        %684 = vmatpush1.bf16.xpose.msra.mxu0 0
        %685 = vmatprep.subr.bf16.mxu0 0
        %686 = vmatpush1.bf16.xpose.msra.mxu0 0
        %687 = vmatprep.subr.bf16.mxu0 0
        %688 = vmatpush1.bf16.xpose.msra.mxu0 0
        %689 = vmatprep.subr.bf16.mxu0 0
        %690 = vmatpush1.bf16.xpose.msra.mxu0 0
        %691 = vmatprep.subr.bf16.mxu0 0
        %692 = vmatpush1.bf16.xpose.msra.mxu0 0
        %693 = vmatprep.subr.bf16.mxu0 0
        %694 = vmatpush1.bf16.xpose.msra.mxu0 0
        %695 = vmatprep.subr.bf16.mxu0 0
        %696 = vmatpush1.bf16.xpose.msra.mxu0 0
        %697 = vmatprep.subr.bf16.mxu0 0
        %698 = vmatpush1.bf16.xpose.msra.mxu0 0
        %699 = vmatprep.mubr.bf16.mxu0 0
        %700 = vmatmul.mubr.bf16.gmra.mrb[0].mxu0 %v662
        %v701 = vpop.f32.mrb[0].mxu0
        %v702 = vadd.f32 0.0, %v701
        %v703 = vpop.f32.mrb[0].mxu0
        %v704 = vpop.f32.mrb[0].mxu0
        %v705 = vpop.f32.mrb[0].mxu0
        %706 = vdwg.mxu0
        %v707 = vsel %vm321, %v702, -1e+30
        %v708 = vsel %vm326, %v707, -inf
        %709 = vmax.xlane.f32.xlu0 %v708
        %v710 = vpop.xlane.xlu0 %709
        %v711 = vsub.f32 %v707, %v710
        %v712 = vmul.f32 %v711, 1.442695
        %v713 = vpow.pop %v712
        %v714 = vsel %vm326, %v713, 0.0
        %715 = vadd.xlane.f32.xlu0 %v714
        %v716 = vpop.xlane.xlu0 %715
        %v717 = vrcp.pop %v716
        %v718 = vmul.f32 %v713, %v717
        %v719 = vpack.c.bf16 %v718, %v718
        %720 = vrot.lane.b32.xlu0 %v322, 40
        %v721 = vpop.permute.xlu0 %720
        %v723 = vsel %vm326, %v719, 0
        %v726 = vsel %vm391, %v721, 0
        %728 = vmatprep.subr.bf16.mxu0 0
        %729 = vmatpush1.bf16.msra.mxu0 %v726
        %730 = vmatprep.subr.bf16.mxu0 0
        %731 = vmatpush1.bf16.msra.mxu0 0
        %732 = vmatprep.subr.bf16.mxu0 0
        %733 = vmatpush1.bf16.msra.mxu0 0
        %734 = vmatprep.subr.bf16.mxu0 0
        %735 = vmatpush1.bf16.msra.mxu0 0
        %736 = vmatprep.subr.bf16.mxu0 0
        %737 = vmatpush1.bf16.msra.mxu0 0
        %738 = vmatprep.subr.bf16.mxu0 0
        %739 = vmatpush1.bf16.msra.mxu0 0
        %740 = vmatprep.subr.bf16.mxu0 0
        %741 = vmatpush1.bf16.msra.mxu0 0
        %742 = vmatprep.subr.bf16.mxu0 0
        %743 = vmatpush1.bf16.msra.mxu0 0
        %744 = vmatprep.subr.bf16.mxu0 0
        %745 = vmatpush1.bf16.msra.mxu0 0
        %746 = vmatprep.subr.bf16.mxu0 0
        %747 = vmatpush1.bf16.msra.mxu0 0
        %748 = vmatprep.subr.bf16.mxu0 0
        %749 = vmatpush1.bf16.msra.mxu0 0
        %750 = vmatprep.subr.bf16.mxu0 0
        %751 = vmatpush1.bf16.msra.mxu0 0
        %752 = vmatprep.subr.bf16.mxu0 0
        %753 = vmatpush1.bf16.msra.mxu0 0
        %754 = vmatprep.subr.bf16.mxu0 0
        %755 = vmatpush1.bf16.msra.mxu0 0
        %756 = vmatprep.subr.bf16.mxu0 0
        %757 = vmatpush1.bf16.msra.mxu0 0
        %758 = vmatprep.subr.bf16.mxu0 0
        %759 = vmatpush1.bf16.msra.mxu0 0
        %760 = vmatprep.mubr.bf16.mxu0 0
        %761 = vmatmul.mubr.bf16.gmra.mrb[0].mxu0 %v723
        %v762 = vpop.f32.mrb[0].mxu0
        %v763 = vadd.f32 0.0, %v762
        %v764 = vpop.f32.mrb[0].mxu0
        %v765 = vpop.f32.mrb[0].mxu0
        %v766 = vpop.f32.mrb[0].mxu0
        %767 = vdwg.mxu0
        %769 = vrot.lane.b32.xlu0 %v541, 8
        %v770 = vpop.permute.xlu0 %769
        %773 = vrot.lane.b32.xlu0 %v652, 16
        %v774 = vpop.permute.xlu0 %773
        %777 = vrot.lane.b32.xlu0 %v763, 24
        %v778 = vpop.permute.xlu0 %777
        %v780 = vsel %vm326, %v430, %v770
        %vm781 = vcmask 130048
        %v782 = vsel %vm781, %v780, %v774
        %vm783 = vcmask 195584
        %v784 = vsel %vm783, %v782, %v778
        %v785 = vpack.c.bf16 %v784, %v784
        %v786 = vld [vmem:[#allocation7] sm:$0xf]
        %v787 = vld [vmem:[#allocation7 + $0x4] sm:$0xf]
        %v788 = vld [vmem:[#allocation7 + $0x8] sm:$0xf]
        %v789 = vld [vmem:[#allocation7 + $0xc] sm:$0xf]
        %v790 = vld [vmem:[#allocation8] sm:$0x1]
        %v792 = vlaneseq
        %v793 = vshrl.u32 %v792, 7
        %v794 = vsub.s32 0, %v793
        %v795 = vrot.slane %v790, %v794
        %v801 = vunpack.c.l.b16 %v786
        %v802 = vunpack.c.l.b16 %v787
        %v803 = vunpack.c.l.b16 %v788
        %v804 = vunpack.c.l.b16 %v789
        %v805 = vpack.c.b16 %v802, %v801
        %v806 = vpack.c.b16 %v804, %v803
        %v810 = vsel %vm273, %v785, 0
        %812 = vmatprep.subr.bf16.mxu0 0
        %813 = vmatpush1.bf16.msra.mxu0 %v805
        %814 = vmatprep.subr.bf16.mxu0 0
        %815 = vmatpush1.bf16.msra.mxu0 %v806
        %816 = vmatprep.subr.bf16.mxu0 0
        %817 = vmatpush1.bf16.msra.mxu0 0
        %818 = vmatprep.subr.bf16.mxu0 0
        %819 = vmatpush1.bf16.msra.mxu0 0
        %820 = vmatprep.subr.bf16.mxu0 0
        %821 = vmatpush1.bf16.msra.mxu0 0
        %822 = vmatprep.subr.bf16.mxu0 0
        %823 = vmatpush1.bf16.msra.mxu0 0
        %824 = vmatprep.subr.bf16.mxu0 0
        %825 = vmatpush1.bf16.msra.mxu0 0
        %826 = vmatprep.subr.bf16.mxu0 0
        %827 = vmatpush1.bf16.msra.mxu0 0
        %828 = vmatprep.subr.bf16.mxu0 0
        %829 = vmatpush1.bf16.msra.mxu0 0
        %830 = vmatprep.subr.bf16.mxu0 0
        %831 = vmatpush1.bf16.msra.mxu0 0
        %832 = vmatprep.subr.bf16.mxu0 0
        %833 = vmatpush1.bf16.msra.mxu0 0
        %834 = vmatprep.subr.bf16.mxu0 0
        %835 = vmatpush1.bf16.msra.mxu0 0
        %836 = vmatprep.subr.bf16.mxu0 0
        %837 = vmatpush1.bf16.msra.mxu0 0
        %838 = vmatprep.subr.bf16.mxu0 0
        %839 = vmatpush1.bf16.msra.mxu0 0
        %840 = vmatprep.subr.bf16.mxu0 0
        %841 = vmatpush1.bf16.msra.mxu0 0
        %842 = vmatprep.subr.bf16.mxu0 0
        %843 = vmatpush1.bf16.msra.mxu0 0
        %844 = vmatprep.mubr.bf16.mxu0 0
        %845 = vmatmul.mubr.bf16.gmra.mrb[0].mxu0 %v810
        %v846 = vpop.f32.mrb[0].mxu0
        %v847 = vadd.f32 %v795, %v846
        %v848 = vpop.f32.mrb[0].mxu0
        %v849 = vpop.f32.mrb[0].mxu0
        %v850 = vpop.f32.mrb[0].mxu0
        %851 = vdwg.mxu0
        %852 = vst.msk [vmem:[%s254] sm:$0xff] %vm273, %v847
        %s853 = sand.u32 %s120, 1
        %s854 = scalar_lea.sflag [#allocation4], %s853
        %s855 = sand.u32 %s120, 1
        %s856 = smul.addr %s855, 8
        %s857 = scalar_lea.vmem [#allocation10], %s856
        // Predicated region
        $region53: #{tpu_custom_call.1} parent=35 // pred_check
          %p858 = pneg %p130
        $region54: #{tpu_custom_call.1} parent=35 // pred_check_branch
          %860 = sbr.rel (%p858) target = $region56
        $region55: #{tpu_custom_call.1} parent=35 // pred_region
          %s862 = ssub.s32 128, 128
          %863 = vsyncadd %s854, %s862
          %s864 = smul.addr %s23, 128
          %s865 = scalar_lea.hbm %s4, %s864
          %s867 = sshll.u32 %s857, 4
          %s868 = int_to_ptr.vmem [resolvable:$true] %s867
          %870 = dma.vmem_to_hbm [thread:$0]  %s868, 128, %s865, %s854
        $region56: #{tpu_custom_call.1} parent=35 // pred_fallthru
          _
      $region36: #{tpu_custom_call.1} parent=5 // pred_fallthru
        _
      %p871 = scmp.le.s32.totalorder 2, %s18
      // Predicated region
      $region57: #{tpu_custom_call.1} parent=5 // pred_check
        %p872 = pneg %p871
      $region58: #{tpu_custom_call.1} parent=5 // pred_check_branch
        %874 = sbr.rel (%p872) target = $region60
      $region59: #{tpu_custom_call.1} parent=5 // pred_region
        %s875 = ssub.s32 %s18, 2
        // Predicated region
        $region61: #{tpu_custom_call.1} parent=59 // pred_check
          %p876 = pneg %p136
        $region62: #{tpu_custom_call.1} parent=59 // pred_check_branch
          %878 = sbr.rel (%p876) target = $region64
        $region63: #{tpu_custom_call.1} parent=59 // pred_region
          %s879 = sand.u32 %s121, 1
          %s880 = scalar_lea.sflag [#allocation4], %s879
          %s881 = sand.u32 %s121, 1
          %s882 = smul.addr %s881, 8
          %s883 = scalar_lea.vmem [#allocation10], %s882
          %884 = dma.done %s880, 128
        $region64: #{tpu_custom_call.1} parent=59 // pred_fallthru
          _
      $region60: #{tpu_custom_call.1} parent=5 // pred_fallthru
        _
    $region6: #{tpu_custom_call.1} parent=1 // loop_footer
      %s22 = sadd.s32 1, %s18
    $region7: #{tpu_custom_call.1} parent=1 // loop_footer_branch
      %17 = sbr.rel target = $region3
    $region8: #{tpu_custom_call.1} parent=1 // loop_exit
      _
    %885 = vsyncpa [#allocation3], 1
    %s886 = scalar_lea.sflag [#allocation3], 1
    %887 = vsyncpa %s886, 1
    %888 = vsyncpa [#allocation6], 1
    %889 = vsyncpa [#allocation9], 1
    %890 = vsyncpa [#allocation4], 1
    %s891 = scalar_lea.sflag [#allocation4], 1
    %892 = vsyncpa %s891, 1

</llo_original>
